<compile_context>
chip_gen: v7x
topology: tpu7x:2x2x1
jax: 0.10.0
libtpu: 0.0.40
codegen_flags: <defaults>
</compile_context>

<pallas_src>
import functools

import jax
import jax.numpy as jnp
from jax.experimental import pallas as pl
from jax.experimental.pallas import tpu as pltpu

LANE = 128
SUBLANE = 8


def _round_up(x, m):
    return ((x + m - 1) // m) * m


def _pad2d(x, rows, cols):
    r, c = x.shape
    return jnp.pad(x, ((0, rows - r), (0, cols - c)))


# ----------------------------- fused Pallas kernel --------------------------

def _fused_gcn_kernel(*refs, n_layers):
    # refs = (a, x, emb_w, emb_b, w0, b0, ..., w_{L-1}, b_{L-1}, o, h_scratch)
    a_ref, x_ref, emb_w_ref, emb_b_ref = refs[:4]
    conv_refs = refs[4:4 + 2 * n_layers]
    o_ref = refs[4 + 2 * n_layers]
    h_ref = refs[5 + 2 * n_layers]          # VMEM scratch, h resident across layers

    # embedding_h: h = x @ W + b   (f32 MXU accumulate)
    h_ref[...] = (
        jnp.dot(x_ref[...], emb_w_ref[...], preferred_element_type=jnp.float32)
        + emb_b_ref[...]
    )

    a = a_ref[...]                          # pre-normalized adjacency (loaded once)
    for i in range(n_layers):
        w = conv_refs[2 * i][...]
        b = conv_refs[2 * i + 1][...]
        # GraphConv(norm='both'):  A_norm @ (h @ W) + b
        # (hW first: f_out <= f_in, so the NxN aggregation runs on fewer lanes)
        hw = jnp.dot(h_ref[...], w, preferred_element_type=jnp.float32)
        y = jnp.dot(a, hw, preferred_element_type=jnp.float32) + b
        if i < n_layers - 1:
            # TODO(synk): dropout p=0 (module default) -> identity; p>0 would need
            # pltpu.prng_random_bits masking here.
            h_ref[...] = jnp.maximum(y, 0.0)      # relu on hidden layers
        else:
            o_ref[...] = y.astype(o_ref.dtype)    # last layer: no activation


# ----------------------------- wrapper ---------------------------------------

def gcn_forward(params, adj, feats):
    n, f_in = feats.shape
    hidden = params["emb_w"].shape[1]
    n_layers = len(params["conv_w"])
    n_classes = params["conv_w"][-1].shape[1]

    # --- plain-JAX precompute, shared by every layer -------------------------
    deg = jnp.maximum(jnp.sum(adj, axis=1, keepdims=True), 1.0)   # DGL degree clamp
    norm = 1.0 / jnp.sqrt(deg)                                    # (N, 1)
    a_norm = (norm * adj) * norm.T                                # D^-1/2 A D^-1/2

    # --- zero-pad to lane/sublane friendly shapes (math-preserving) ----------
    n_p = _round_up(n, SUBLANE)
    f_p = _round_up(f_in, LANE)
    h_p = _round_up(hidden, LANE)
    c_p = _round_up(n_classes, LANE)

    args = [
        _pad2d(a_norm, n_p, n_p),
        _pad2d(feats, n_p, f_p),
        _pad2d(params["emb_w"], f_p, h_p),
        _pad2d(params["emb_b"], 1, h_p),
    ]
    for i in range(n_layers):
        out_p = c_p if i == n_layers - 1 else h_p
        args.append(_pad2d(params["conv_w"][i], h_p, out_p))
        args.append(_pad2d(params["conv_b"][i], 1, out_p))

    def full(shape):
        return pl.BlockSpec(shape, lambda i, _s=shape: tuple(0 for _ in _s))

    # advisory cost estimate for XLA scheduling around the custom call
    flops = 2 * n_p * f_p * h_p
    for i in range(n_layers):
        out_p = c_p if i == n_layers - 1 else h_p
        flops += 2 * n_p * h_p * out_p          # h @ W
        flops += 2 * n_p * n_p * out_p          # A_norm @ (hW)
    bytes_accessed = sum(int(a.size) * 4 for a in args) + n_p * c_p * 4

    kernel = functools.partial(_fused_gcn_kernel, n_layers=n_layers)
    out_padded = pl.pallas_call(
        kernel,
        out_shape=jax.ShapeDtypeStruct((n_p, c_p), feats.dtype),
        grid=(1,),
        in_specs=[full(a.shape) for a in args],
        out_specs=full((n_p, c_p)),
        scratch_shapes=[pltpu.VMEM((n_p, h_p), jnp.float32)],
        compiler_params=pltpu.CompilerParams(
            dimension_semantics=("arbitrary",)),
        cost_estimate=pl.CostEstimate(
            flops=flops, transcendentals=0, bytes_accessed=bytes_accessed),
    )(*args)

    return out_padded[:n, :n_classes]


# ----------------------------- params ----------------------------------------

def init_gcn_params(key, in_features, hidden_features, n_classes, n_layers):
    """Parameter shapes match the PyTorch module.

    Init is Glorot/Kaiming-uniform-flavored; exact RNG streams differ from
    torch defaults (forward math is identical for any given weights).
    """
    params = {}
    k = key

    def uni(k, shape, bound):
        return jax.random.uniform(k, shape, jnp.float32, -bound, bound)

    k, sub = jax.random.split(k)
    params["emb_w"] = uni(sub, (in_features, hidden_features),
                          1.0 / jnp.sqrt(in_features))
    k, sub = jax.random.split(k)
    params["emb_b"] = uni(sub, (1, hidden_features), 1.0 / jnp.sqrt(in_features))

    layer_dims = [(hidden_features, hidden_features)] * (n_layers - 1) + \
                 [(hidden_features, n_classes)]
    params["conv_w"] = []
    params["conv_b"] = []
    for (fi, fo) in layer_dims:
        k, sub = jax.random.split(k)
        bound = jnp.sqrt(6.0 / (fi + fo))
        params["conv_w"].append(uni(sub, (fi, fo), bound))
        params["conv_b"].append(jnp.zeros((1, fo), jnp.float32))
    return params


# ----------------------------- main -------------------------------------------

if __name__ == "__main__":
    N = 64            # nodes
    IN_FEATS = 16
    HIDDEN = 32
    N_CLASSES = 8
    N_LAYERS = 2

    key = jax.random.PRNGKey(0)
    k_feat, k_adj, k_param = jax.random.split(key, 3)

    # node features
    feats = jax.random.normal(k_feat, (N, IN_FEATS), jnp.float32)

    # random symmetric adjacency with self-loops (dense representation of g)
    rand = jax.random.uniform(k_adj, (N, N))
    adj = (rand < 0.1).astype(jnp.float32)
    adj = jnp.maximum(adj, adj.T)                           # undirected
    adj = jnp.maximum(adj, jnp.eye(N, dtype=jnp.float32))   # self-loops

    params = init_gcn_params(k_param, IN_FEATS, HIDDEN, N_CLASSES, N_LAYERS)

    out = gcn_forward(params, adj, feats)
    out = jax.block_until_ready(out)
    assert out.shape == (N, N_CLASSES), out.shape
    print("KERNEL_OK")
</pallas_src>

<mosaic_0001>
module attributes {stable_mosaic.version = 11 : i64} {
  func.func @_fused_gcn_kernel(%arg0: i32, %arg1: memref<64x64xf32, #tpu.memory_space<vmem>>, %arg2: memref<64x128xf32, #tpu.memory_space<vmem>>, %arg3: memref<128x128xf32, #tpu.memory_space<vmem>>, %arg4: memref<1x128xf32, #tpu.memory_space<vmem>>, %arg5: memref<128x128xf32, #tpu.memory_space<vmem>>, %arg6: memref<1x128xf32, #tpu.memory_space<vmem>>, %arg7: memref<128x128xf32, #tpu.memory_space<vmem>>, %arg8: memref<1x128xf32, #tpu.memory_space<vmem>>, %arg9: memref<64x128xf32, #tpu.memory_space<vmem>>, %arg10: memref<64x128xf32, #tpu.memory_space<vmem>>) attributes {dimension_semantics = [#tpu.dimension_semantics<arbitrary>], iteration_bounds = array<i64: 1>, scalar_prefetch = 0 : i64, scratch_operands = 1 : i64, tpu.core_type = #tpu.core_type<tc>, window_params = [{pipeline_mode = #tpu.pipeline_mode<synchronous>, transform_indices = @transform_0, window_bounds = array<i64: 64, 64>}, {pipeline_mode = #tpu.pipeline_mode<synchronous>, transform_indices = @transform_1, window_bounds = array<i64: 64, 128>}, {pipeline_mode = #tpu.pipeline_mode<synchronous>, transform_indices = @transform_2, window_bounds = array<i64: 128, 128>}, {pipeline_mode = #tpu.pipeline_mode<synchronous>, transform_indices = @transform_3, window_bounds = array<i64: 1, 128>}, {pipeline_mode = #tpu.pipeline_mode<synchronous>, transform_indices = @transform_4, window_bounds = array<i64: 128, 128>}, {pipeline_mode = #tpu.pipeline_mode<synchronous>, transform_indices = @transform_5, window_bounds = array<i64: 1, 128>}, {pipeline_mode = #tpu.pipeline_mode<synchronous>, transform_indices = @transform_6, window_bounds = array<i64: 128, 128>}, {pipeline_mode = #tpu.pipeline_mode<synchronous>, transform_indices = @transform_7, window_bounds = array<i64: 1, 128>}, {pipeline_mode = #tpu.pipeline_mode<synchronous>, transform_indices = @transform_8, window_bounds = array<i64: 64, 128>}]} {
    %c0 = arith.constant 0 : index
    %c0_0 = arith.constant 0 : index
    %0 = vector.load %arg2[%c0, %c0_0] : memref<64x128xf32, #tpu.memory_space<vmem>>, vector<64x128xf32>
    %c0_1 = arith.constant 0 : index
    %c0_2 = arith.constant 0 : index
    %1 = vector.load %arg3[%c0_1, %c0_2] : memref<128x128xf32, #tpu.memory_space<vmem>>, vector<128x128xf32>
    %cst = arith.constant dense<0.000000e+00> : vector<64x128xf32>
    %2 = tpu.matmul %0, %1, %cst {dimension_numbers = #tpu.dot_dimension_numbers<[1], [0], [0], [1], [0, 0, 1, 1], [], []>} : vector<64x128xf32>, vector<128x128xf32>, vector<64x128xf32> -> vector<64x128xf32>
    %c0_3 = arith.constant 0 : index
    %c0_4 = arith.constant 0 : index
    %3 = vector.load %arg4[%c0_3, %c0_4] : memref<1x128xf32, #tpu.memory_space<vmem>>, vector<1x128xf32>
    %4 = vector.broadcast %3 : vector<1x128xf32> to vector<64x128xf32>
    %5 = arith.addf %2, %4 : vector<64x128xf32>
    %c0_5 = arith.constant 0 : index
    %c0_6 = arith.constant 0 : index
    %6 = vector.load %arg10[%c0_5, %c0_6] : memref<64x128xf32, #tpu.memory_space<vmem>>, vector<64x128xf32>
    tpu.vector_store %arg10[%c0_5, %c0_6], %5 {strides = array<i32>} : memref<64x128xf32, #tpu.memory_space<vmem>>, vector<64x128xf32>,
    %c0_7 = arith.constant 0 : index
    %c0_8 = arith.constant 0 : index
    %7 = vector.load %arg1[%c0_7, %c0_8] : memref<64x64xf32, #tpu.memory_space<vmem>>, vector<64x64xf32>
    %c0_9 = arith.constant 0 : index
    %c0_10 = arith.constant 0 : index
    %8 = vector.load %arg5[%c0_9, %c0_10] : memref<128x128xf32, #tpu.memory_space<vmem>>, vector<128x128xf32>
    %c0_11 = arith.constant 0 : index
    %c0_12 = arith.constant 0 : index
    %9 = vector.load %arg6[%c0_11, %c0_12] : memref<1x128xf32, #tpu.memory_space<vmem>>, vector<1x128xf32>
    %c0_13 = arith.constant 0 : index
    %c0_14 = arith.constant 0 : index
    %10 = vector.load %arg10[%c0_13, %c0_14] : memref<64x128xf32, #tpu.memory_space<vmem>>, vector<64x128xf32>
    %cst_15 = arith.constant dense<0.000000e+00> : vector<64x128xf32>
    %11 = tpu.matmul %10, %8, %cst_15 {dimension_numbers = #tpu.dot_dimension_numbers<[1], [0], [0], [1], [0, 0, 1, 1], [], []>} : vector<64x128xf32>, vector<128x128xf32>, vector<64x128xf32> -> vector<64x128xf32>
    %cst_16 = arith.constant dense<0.000000e+00> : vector<64x128xf32>
    %12 = tpu.matmul %7, %11, %cst_16 {dimension_numbers = #tpu.dot_dimension_numbers<[1], [0], [0], [1], [0, 0, 1, 1], [], []>} : vector<64x64xf32>, vector<64x128xf32>, vector<64x128xf32> -> vector<64x128xf32>
    %13 = vector.broadcast %9 : vector<1x128xf32> to vector<64x128xf32>
    %14 = arith.addf %12, %13 : vector<64x128xf32>
    %cst_17 = arith.constant 0.000000e+00 : f32
    %15 = vector.broadcast %cst_17 : f32 to vector<64x128xf32>
    %16 = arith.maximumf %14, %15 : vector<64x128xf32>
    %c0_18 = arith.constant 0 : index
    %c0_19 = arith.constant 0 : index
    %17 = vector.load %arg10[%c0_18, %c0_19] : memref<64x128xf32, #tpu.memory_space<vmem>>, vector<64x128xf32>
    tpu.vector_store %arg10[%c0_18, %c0_19], %16 {strides = array<i32>} : memref<64x128xf32, #tpu.memory_space<vmem>>, vector<64x128xf32>,
    %c0_20 = arith.constant 0 : index
    %c0_21 = arith.constant 0 : index
    %18 = vector.load %arg7[%c0_20, %c0_21] : memref<128x128xf32, #tpu.memory_space<vmem>>, vector<128x128xf32>
    %c0_22 = arith.constant 0 : index
    %c0_23 = arith.constant 0 : index
    %19 = vector.load %arg8[%c0_22, %c0_23] : memref<1x128xf32, #tpu.memory_space<vmem>>, vector<1x128xf32>
    %c0_24 = arith.constant 0 : index
    %c0_25 = arith.constant 0 : index
    %20 = vector.load %arg10[%c0_24, %c0_25] : memref<64x128xf32, #tpu.memory_space<vmem>>, vector<64x128xf32>
    %cst_26 = arith.constant dense<0.000000e+00> : vector<64x128xf32>
    %21 = tpu.matmul %20, %18, %cst_26 {dimension_numbers = #tpu.dot_dimension_numbers<[1], [0], [0], [1], [0, 0, 1, 1], [], []>} : vector<64x128xf32>, vector<128x128xf32>, vector<64x128xf32> -> vector<64x128xf32>
    %cst_27 = arith.constant dense<0.000000e+00> : vector<64x128xf32>
    %22 = tpu.matmul %7, %21, %cst_27 {dimension_numbers = #tpu.dot_dimension_numbers<[1], [0], [0], [1], [0, 0, 1, 1], [], []>} : vector<64x64xf32>, vector<64x128xf32>, vector<64x128xf32> -> vector<64x128xf32>
    %23 = vector.broadcast %19 : vector<1x128xf32> to vector<64x128xf32>
    %24 = arith.addf %22, %23 : vector<64x128xf32>
    %c0_28 = arith.constant 0 : index
    %c0_29 = arith.constant 0 : index
    %25 = vector.load %arg9[%c0_28, %c0_29] : memref<64x128xf32, #tpu.memory_space<vmem>>, vector<64x128xf32>
    tpu.vector_store %arg9[%c0_28, %c0_29], %24 {strides = array<i32>} : memref<64x128xf32, #tpu.memory_space<vmem>>, vector<64x128xf32>,
    return
  }
  func.func @transform_0(%arg0: i32) -> (i32, i32) {
    %c0_i32 = arith.constant 0 : i32
    %c0_i32_0 = arith.constant 0 : i32
    %c0_i32_1 = arith.constant 0 : i32
    return %c0_i32, %c0_i32_0 : i32, i32
  }
  func.func @transform_1(%arg0: i32) -> (i32, i32) {
    %c0_i32 = arith.constant 0 : i32
    %c0_i32_0 = arith.constant 0 : i32
    %c0_i32_1 = arith.constant 0 : i32
    return %c0_i32, %c0_i32_0 : i32, i32
  }
  func.func @transform_2(%arg0: i32) -> (i32, i32) {
    %c0_i32 = arith.constant 0 : i32
    %c0_i32_0 = arith.constant 0 : i32
    %c0_i32_1 = arith.constant 0 : i32
    return %c0_i32, %c0_i32_0 : i32, i32
  }
  func.func @transform_3(%arg0: i32) -> (i32, i32) {
    %c0_i32 = arith.constant 0 : i32
    %c0_i32_0 = arith.constant 0 : i32
    %c0_i32_1 = arith.constant 0 : i32
    return %c0_i32, %c0_i32_0 : i32, i32
  }
  func.func @transform_4(%arg0: i32) -> (i32, i32) {
    %c0_i32 = arith.constant 0 : i32
    %c0_i32_0 = arith.constant 0 : i32
    %c0_i32_1 = arith.constant 0 : i32
    return %c0_i32, %c0_i32_0 : i32, i32
  }
  func.func @transform_5(%arg0: i32) -> (i32, i32) {
    %c0_i32 = arith.constant 0 : i32
    %c0_i32_0 = arith.constant 0 : i32
    %c0_i32_1 = arith.constant 0 : i32
    return %c0_i32, %c0_i32_0 : i32, i32
  }
  func.func @transform_6(%arg0: i32) -> (i32, i32) {
    %c0_i32 = arith.constant 0 : i32
    %c0_i32_0 = arith.constant 0 : i32
    %c0_i32_1 = arith.constant 0 : i32
    return %c0_i32, %c0_i32_0 : i32, i32
  }
  func.func @transform_7(%arg0: i32) -> (i32, i32) {
    %c0_i32 = arith.constant 0 : i32
    %c0_i32_0 = arith.constant 0 : i32
    %c0_i32_1 = arith.constant 0 : i32
    return %c0_i32, %c0_i32_0 : i32, i32
  }
  func.func @transform_8(%arg0: i32) -> (i32, i32) {
    %c0_i32 = arith.constant 0 : i32
    %c0_i32_0 = arith.constant 0 : i32
    %c0_i32_1 = arith.constant 0 : i32
    return %c0_i32, %c0_i32_0 : i32, i32
  }
}

</mosaic_0001>

<llo_original>
// kernel: tpu_custom_call.1
$region0: #{tpu_custom_call.1}
  #allocation0 [shape = 'u32[]', space=smem, size = 0x4, offset = 0x4, fixed_abs, tag = 'smem constant byte address 0x4 - core index']
  #allocation1 [shape = 'u32[144,128]{1,0:T(1,128)}', space=vmem, size = 0x12000, scoped, tag = 'internal scratch']
  #allocation2 [shape = 'f32[64,128]{1,0:T(8,128)}', space=vmem, size = 0x8000, scoped, tag = 'scratch operand']
  %s0 = inlined_call_operand.hbm [shape: f32[64,64], index: 0, kind: input, shape index: {}]
  %s1 = inlined_call_operand.hbm [shape: f32[64,128], index: 1, kind: input, shape index: {}]
  %s2 = inlined_call_operand.hbm [shape: f32[128,128], index: 2, kind: input, shape index: {}]
  %s3 = inlined_call_operand.vmem [shape: f32[1,128], index: 3, kind: input, shape index: {}]
  %s4 = inlined_call_operand.hbm [shape: f32[128,128], index: 4, kind: input, shape index: {}]
  %s5 = inlined_call_operand.vmem [shape: f32[1,128], index: 5, kind: input, shape index: {}]
  %s6 = inlined_call_operand.hbm [shape: f32[128,128], index: 6, kind: input, shape index: {}]
  %s7 = inlined_call_operand.vmem [shape: f32[1,128], index: 7, kind: input, shape index: {}]
  %s8 = inlined_call_operand.hbm [shape: f32[64,128], index: 8, kind: output, shape index: {}]
  %s9 = sld [smem:[#allocation0]]
  $region62: #{tpu_custom_call.1} parent=0
    _
  %s11 = ssub.s32 1, %s9
  %s12 = scalar_select 0, %s11, %s9
  $region1: #{tpu_custom_call.1} parent=0
    #allocation3 [shape = 'u8[32768]{0}', space=vmem, size = 0x8000, scoped, tag = 'input window, operand 0, single buffered']
    #allocation4 [shape = 's32[1]{0}', space=sflag, size = 0x4, scoped, tag = 'scoped memory for tpu_custom_call.1']
    #allocation5 [shape = 's32[1]{0}', space=sflag, size = 0x4, scoped, tag = 'scoped memory for tpu_custom_call.1']
    #allocation6 [shape = 'u8[32768]{0}', space=vmem, size = 0x8000, scoped, tag = 'input window, operand 1, single buffered']
    #allocation7 [shape = 's32[1]{0}', space=sflag, size = 0x4, scoped, tag = 'scoped memory for tpu_custom_call.1']
    #allocation8 [shape = 'u8[65536]{0}', space=vmem, size = 0x10000, scoped, tag = 'input window, operand 2, single buffered']
    #allocation9 [shape = 'u8[65536]{0}', space=vmem, size = 0x10000, scoped, tag = 'input window, operand 4, single buffered']
    #allocation10 [shape = 's32[1]{0}', space=sflag, size = 0x4, scoped, tag = 'scoped memory for tpu_custom_call.1']
    #allocation11 [shape = 'u8[65536]{0}', space=vmem, size = 0x10000, scoped, tag = 'input window, operand 6, single buffered']
    #allocation12 [shape = 'u8[32768]{0}', space=vmem, size = 0x8000, scoped, tag = 'output window, operand 0, single buffered']
    %13 = vsyncpa [#allocation4], 0
    %14 = vsyncpa [#allocation7], 0
    %15 = vsyncpa [#allocation10], 0
    %16 = vsyncpa [#allocation5], 0
    // Predicated region
    $region2: #{tpu_custom_call.1} parent=1 // pred_check
      _
    $region3: #{tpu_custom_call.1} parent=1 // pred_check_branch
      %18 = sbr.rel (0) target = $region5
    $region4: #{tpu_custom_call.1} parent=1 // pred_region
      %s20 = ssub.s32 1024, 1024
      %21 = vsyncadd [#allocation4], %s20
      %s22 = sshll.u32 [#allocation3], 4
      %s23 = int_to_ptr.vmem [resolvable:$true] %s22
      %28 = dma.hbm_to_vmem [thread:$0]  %s0, 1024, %s23, [#allocation4], 128, 128, 8
    $region5: #{tpu_custom_call.1} parent=1 // pred_fallthru
      _
    // Predicated region
    $region6: #{tpu_custom_call.1} parent=1 // pred_check
      _
    $region7: #{tpu_custom_call.1} parent=1 // pred_check_branch
      %30 = sbr.rel (0) target = $region9
    $region8: #{tpu_custom_call.1} parent=1 // pred_region
      %s32 = ssub.s32 1024, 1024
      %33 = vsyncadd [#allocation7], %s32
      %s34 = sshll.u32 [#allocation6], 4
      %s35 = int_to_ptr.vmem [resolvable:$true] %s34
      %40 = dma.hbm_to_vmem [thread:$0]  %s1, 1024, %s35, [#allocation7], 128, 128, 8
    $region9: #{tpu_custom_call.1} parent=1 // pred_fallthru
      _
    // Predicated region
    $region10: #{tpu_custom_call.1} parent=1 // pred_check
      _
    $region11: #{tpu_custom_call.1} parent=1 // pred_check_branch
      %42 = sbr.rel (0) target = $region13
    $region12: #{tpu_custom_call.1} parent=1 // pred_region
      %s44 = ssub.s32 2048, 2048
      %45 = vsyncadd [#allocation7], %s44
      %s46 = sshll.u32 [#allocation8], 4
      %s47 = int_to_ptr.vmem [resolvable:$true] %s46
      %52 = dma.hbm_to_vmem [thread:$0]  %s2, 2048, %s47, [#allocation7], 128, 128, 8
    $region13: #{tpu_custom_call.1} parent=1 // pred_fallthru
      _
    // Predicated region
    $region14: #{tpu_custom_call.1} parent=1 // pred_check
      _
    $region15: #{tpu_custom_call.1} parent=1 // pred_check_branch
      %54 = sbr.rel (0) target = $region17
    $region16: #{tpu_custom_call.1} parent=1 // pred_region
      _
    $region17: #{tpu_custom_call.1} parent=1 // pred_fallthru
      _
    // Predicated region
    $region18: #{tpu_custom_call.1} parent=1 // pred_check
      _
    $region19: #{tpu_custom_call.1} parent=1 // pred_check_branch
      %56 = sbr.rel (0) target = $region21
    $region20: #{tpu_custom_call.1} parent=1 // pred_region
      %s58 = ssub.s32 2048, 2048
      %59 = vsyncadd [#allocation10], %s58
      %s60 = sshll.u32 [#allocation9], 4
      %s61 = int_to_ptr.vmem [resolvable:$true] %s60
      %66 = dma.hbm_to_vmem [thread:$0]  %s4, 2048, %s61, [#allocation10], 128, 128, 8
    $region21: #{tpu_custom_call.1} parent=1 // pred_fallthru
      _
    // Predicated region
    $region22: #{tpu_custom_call.1} parent=1 // pred_check
      _
    $region23: #{tpu_custom_call.1} parent=1 // pred_check_branch
      %68 = sbr.rel (0) target = $region25
    $region24: #{tpu_custom_call.1} parent=1 // pred_region
      _
    $region25: #{tpu_custom_call.1} parent=1 // pred_fallthru
      _
    // Predicated region
    $region26: #{tpu_custom_call.1} parent=1 // pred_check
      _
    $region27: #{tpu_custom_call.1} parent=1 // pred_check_branch
      %70 = sbr.rel (0) target = $region29
    $region28: #{tpu_custom_call.1} parent=1 // pred_region
      %s72 = ssub.s32 2048, 2048
      %73 = vsyncadd [#allocation10], %s72
      %s74 = sshll.u32 [#allocation11], 4
      %s75 = int_to_ptr.vmem [resolvable:$true] %s74
      %80 = dma.hbm_to_vmem [thread:$0]  %s6, 2048, %s75, [#allocation10], 128, 128, 8
    $region29: #{tpu_custom_call.1} parent=1 // pred_fallthru
      _
    // Predicated region
    $region30: #{tpu_custom_call.1} parent=1 // pred_check
      _
    $region31: #{tpu_custom_call.1} parent=1 // pred_check_branch
      %82 = sbr.rel (0) target = $region33
    $region32: #{tpu_custom_call.1} parent=1 // pred_region
      _
    $region33: #{tpu_custom_call.1} parent=1 // pred_fallthru
      _
    // Predicated region
    $region34: #{tpu_custom_call.1} parent=1 // pred_check
      _
    $region35: #{tpu_custom_call.1} parent=1 // pred_check_branch
      %84 = sbr.rel (0) target = $region37
    $region36: #{tpu_custom_call.1} parent=1 // pred_region
      %85 = dma.done [#allocation4], 1024
    $region37: #{tpu_custom_call.1} parent=1 // pred_fallthru
      _
    // Predicated region
    $region38: #{tpu_custom_call.1} parent=1 // pred_check
      _
    $region39: #{tpu_custom_call.1} parent=1 // pred_check_branch
      %87 = sbr.rel (0) target = $region41
    $region40: #{tpu_custom_call.1} parent=1 // pred_region
      %88 = dma.done [#allocation7], 1024
    $region41: #{tpu_custom_call.1} parent=1 // pred_fallthru
      _
    // Predicated region
    $region42: #{tpu_custom_call.1} parent=1 // pred_check
      _
    $region43: #{tpu_custom_call.1} parent=1 // pred_check_branch
      %90 = sbr.rel (0) target = $region45
    $region44: #{tpu_custom_call.1} parent=1 // pred_region
      %91 = dma.done [#allocation7], 2048
    $region45: #{tpu_custom_call.1} parent=1 // pred_fallthru
      _
    // Predicated region
    $region46: #{tpu_custom_call.1} parent=1 // pred_check
      _
    $region47: #{tpu_custom_call.1} parent=1 // pred_check_branch
      %93 = sbr.rel (0) target = $region49
    $region48: #{tpu_custom_call.1} parent=1 // pred_region
      %94 = dma.done [#allocation10], 2048
    $region49: #{tpu_custom_call.1} parent=1 // pred_fallthru
      _
    // Predicated region
    $region50: #{tpu_custom_call.1} parent=1 // pred_check
      _
    $region51: #{tpu_custom_call.1} parent=1 // pred_check_branch
      %96 = sbr.rel (0) target = $region53
    $region52: #{tpu_custom_call.1} parent=1 // pred_region
      %97 = dma.done [#allocation10], 2048
    $region53: #{tpu_custom_call.1} parent=1 // pred_fallthru
      _
    %v98 = vld [vmem:[#allocation6] sm:$0xff]
    %v99 = vld [vmem:[#allocation6 + $0x8] sm:$0xff]
    %v100 = vld [vmem:[#allocation6 + $0x10] sm:$0xff]
    %v101 = vld [vmem:[#allocation6 + $0x18] sm:$0xff]
    %v102 = vld [vmem:[#allocation6 + $0x20] sm:$0xff]
    %v103 = vld [vmem:[#allocation6 + $0x28] sm:$0xff]
    %v104 = vld [vmem:[#allocation6 + $0x30] sm:$0xff]
    %v105 = vld [vmem:[#allocation6 + $0x38] sm:$0xff]
    %v106 = vld [vmem:[#allocation8] sm:$0xff]
    %v107 = vld [vmem:[#allocation8 + $0x8] sm:$0xff]
    %v108 = vld [vmem:[#allocation8 + $0x10] sm:$0xff]
    %v109 = vld [vmem:[#allocation8 + $0x18] sm:$0xff]
    %v110 = vld [vmem:[#allocation8 + $0x20] sm:$0xff]
    %v111 = vld [vmem:[#allocation8 + $0x28] sm:$0xff]
    %v112 = vld [vmem:[#allocation8 + $0x30] sm:$0xff]
    %v113 = vld [vmem:[#allocation8 + $0x38] sm:$0xff]
    %v114 = vld [vmem:[#allocation8 + $0x40] sm:$0xff]
    %v115 = vld [vmem:[#allocation8 + $0x48] sm:$0xff]
    %v116 = vld [vmem:[#allocation8 + $0x50] sm:$0xff]
    %v117 = vld [vmem:[#allocation8 + $0x58] sm:$0xff]
    %v118 = vld [vmem:[#allocation8 + $0x60] sm:$0xff]
    %v119 = vld [vmem:[#allocation8 + $0x68] sm:$0xff]
    %v120 = vld [vmem:[#allocation8 + $0x70] sm:$0xff]
    %v121 = vld [vmem:[#allocation8 + $0x78] sm:$0xff]
    %v122 = vld [vmem:[%s3] sm:$0x1]
    %v124 = vlaneseq
    %v125 = vshrl.u32 %v124, 7
    %v126 = vsub.s32 0, %v125
    %v127 = vrot.slane %v122, %v126
    %129 = vmatprep.subr.mxu0 0.0
    %130 = vmatpush1.msra.mxu0 %v106
    %131 = vmatprep.subr.mxu0 0.0
    %132 = vmatpush1.msra.mxu0 %v107
    %133 = vmatprep.subr.mxu0 0.0
    %134 = vmatpush1.msra.mxu0 %v108
    %135 = vmatprep.subr.mxu0 0.0
    %136 = vmatpush1.msra.mxu0 %v109
    %137 = vmatprep.subr.mxu0 0.0
    %138 = vmatpush1.msra.mxu0 %v110
    %139 = vmatprep.subr.mxu0 0.0
    %140 = vmatpush1.msra.mxu0 %v111
    %141 = vmatprep.subr.mxu0 0.0
    %142 = vmatpush1.msra.mxu0 %v112
    %143 = vmatprep.subr.mxu0 0.0
    %144 = vmatpush1.msra.mxu0 %v113
    %145 = vmatprep.subr.mxu0 0.0
    %146 = vmatpush1.msra.mxu0 %v114
    %147 = vmatprep.subr.mxu0 0.0
    %148 = vmatpush1.msra.mxu0 %v115
    %149 = vmatprep.subr.mxu0 0.0
    %150 = vmatpush1.msra.mxu0 %v116
    %151 = vmatprep.subr.mxu0 0.0
    %152 = vmatpush1.msra.mxu0 %v117
    %153 = vmatprep.subr.mxu0 0.0
    %154 = vmatpush1.msra.mxu0 %v118
    %155 = vmatprep.subr.mxu0 0.0
    %156 = vmatpush1.msra.mxu0 %v119
    %157 = vmatprep.subr.mxu0 0.0
    %158 = vmatpush1.msra.mxu0 %v120
    %159 = vmatprep.subr.mxu0 0.0
    %160 = vmatpush1.msra.mxu0 %v121
    %161 = vmatprep.subr.mxu0 0.0
    %162 = vmatpush1.msra.mxu0 0.0
    %163 = vmatprep.subr.mxu0 0.0
    %164 = vmatpush1.msra.mxu0 0.0
    %165 = vmatprep.subr.mxu0 0.0
    %166 = vmatpush1.msra.mxu0 0.0
    %167 = vmatprep.subr.mxu0 0.0
    %168 = vmatpush1.msra.mxu0 0.0
    %169 = vmatprep.subr.mxu0 0.0
    %170 = vmatpush1.msra.mxu0 0.0
    %171 = vmatprep.subr.mxu0 0.0
    %172 = vmatpush1.msra.mxu0 0.0
    %173 = vmatprep.subr.mxu0 0.0
    %174 = vmatpush1.msra.mxu0 0.0
    %175 = vmatprep.subr.mxu0 0.0
    %176 = vmatpush1.msra.mxu0 0.0
    %177 = vmatprep.subr.mxu0 0.0
    %178 = vmatpush1.msra.mxu0 0.0
    %179 = vmatprep.subr.mxu0 0.0
    %180 = vmatpush1.msra.mxu0 0.0
    %181 = vmatprep.subr.mxu0 0.0
    %182 = vmatpush1.msra.mxu0 0.0
    %183 = vmatprep.subr.mxu0 0.0
    %184 = vmatpush1.msra.mxu0 0.0
    %185 = vmatprep.subr.mxu0 0.0
    %186 = vmatpush1.msra.mxu0 0.0
    %187 = vmatprep.subr.mxu0 0.0
    %188 = vmatpush1.msra.mxu0 0.0
    %189 = vmatprep.subr.mxu0 0.0
    %190 = vmatpush1.msra.mxu0 0.0
    %191 = vmatprep.subr.mxu0 0.0
    %192 = vmatpush1.msra.mxu0 0.0
    %193 = vmatprep.mubr.f32.mxu0 0.0
    %194 = vmatmul.mubr.f32.gmra.mrb[0].mxu0 %v98
    %v195 = vpop.f32.mrb[0].mxu0
    %v196 = vadd.f32 %v127, %v195
    %v197 = vpop.f32.mrb[0].mxu0
    %198 = vmatprep.mubr.f32.mxu0 0.0
    %199 = vmatmul.mubr.f32.gmra.mrb[0].mxu0 %v99
    %v200 = vpop.f32.mrb[0].mxu0
    %v201 = vadd.f32 %v127, %v200
    %v202 = vpop.f32.mrb[0].mxu0
    %203 = vmatprep.mubr.f32.mxu0 0.0
    %204 = vmatmul.mubr.f32.gmra.mrb[0].mxu0 %v100
    %v205 = vpop.f32.mrb[0].mxu0
    %v206 = vadd.f32 %v127, %v205
    %v207 = vpop.f32.mrb[0].mxu0
    %208 = vmatprep.mubr.f32.mxu0 0.0
    %209 = vmatmul.mubr.f32.gmra.mrb[0].mxu0 %v101
    %v210 = vpop.f32.mrb[0].mxu0
    %v211 = vadd.f32 %v127, %v210
    %v212 = vpop.f32.mrb[0].mxu0
    %213 = vmatprep.mubr.f32.mxu0 0.0
    %214 = vmatmul.mubr.f32.gmra.mrb[0].mxu0 %v102
    %v215 = vpop.f32.mrb[0].mxu0
    %v216 = vadd.f32 %v127, %v215
    %v217 = vpop.f32.mrb[0].mxu0
    %218 = vmatprep.mubr.f32.mxu0 0.0
    %219 = vmatmul.mubr.f32.gmra.mrb[0].mxu0 %v103
    %v220 = vpop.f32.mrb[0].mxu0
    %v221 = vadd.f32 %v127, %v220
    %v222 = vpop.f32.mrb[0].mxu0
    %223 = vmatprep.mubr.f32.mxu0 0.0
    %224 = vmatmul.mubr.f32.gmra.mrb[0].mxu0 %v104
    %v225 = vpop.f32.mrb[0].mxu0
    %v226 = vadd.f32 %v127, %v225
    %v227 = vpop.f32.mrb[0].mxu0
    %228 = vmatprep.mubr.f32.mxu0 0.0
    %229 = vmatmul.mubr.f32.gmra.mrb[0].mxu0 %v105
    %v230 = vpop.f32.mrb[0].mxu0
    %v231 = vadd.f32 %v127, %v230
    %v232 = vpop.f32.mrb[0].mxu0
    %233 = vdwg.mxu0
    %234 = vst [vmem:[#allocation2] sm:$0xff] %v196
    %235 = vst [vmem:[#allocation2 + $0x8] sm:$0xff] %v201
    %236 = vst [vmem:[#allocation2 + $0x10] sm:$0xff] %v206
    %237 = vst [vmem:[#allocation2 + $0x18] sm:$0xff] %v211
    %238 = vst [vmem:[#allocation2 + $0x20] sm:$0xff] %v216
    %239 = vst [vmem:[#allocation2 + $0x28] sm:$0xff] %v221
    %240 = vst [vmem:[#allocation2 + $0x30] sm:$0xff] %v226
    %241 = vst [vmem:[#allocation2 + $0x38] sm:$0xff] %v231
    %v242 = vld [vmem:[#allocation3] sm:$0xff]
    %v243 = vld [vmem:[#allocation3 + $0x8] sm:$0xff]
    %v244 = vld [vmem:[#allocation3 + $0x10] sm:$0xff]
    %v245 = vld [vmem:[#allocation3 + $0x18] sm:$0xff]
    %v246 = vld [vmem:[#allocation3 + $0x20] sm:$0xff]
    %v247 = vld [vmem:[#allocation3 + $0x28] sm:$0xff]
    %v248 = vld [vmem:[#allocation3 + $0x30] sm:$0xff]
    %v249 = vld [vmem:[#allocation3 + $0x38] sm:$0xff]
    %v250 = vld [vmem:[#allocation9] sm:$0xff]
    %v251 = vld [vmem:[#allocation9 + $0x8] sm:$0xff]
    %v252 = vld [vmem:[#allocation9 + $0x10] sm:$0xff]
    %v253 = vld [vmem:[#allocation9 + $0x18] sm:$0xff]
    %v254 = vld [vmem:[#allocation9 + $0x20] sm:$0xff]
    %v255 = vld [vmem:[#allocation9 + $0x28] sm:$0xff]
    %v256 = vld [vmem:[#allocation9 + $0x30] sm:$0xff]
    %v257 = vld [vmem:[#allocation9 + $0x38] sm:$0xff]
    %v258 = vld [vmem:[#allocation9 + $0x40] sm:$0xff]
    %v259 = vld [vmem:[#allocation9 + $0x48] sm:$0xff]
    %v260 = vld [vmem:[#allocation9 + $0x50] sm:$0xff]
    %v261 = vld [vmem:[#allocation9 + $0x58] sm:$0xff]
    %v262 = vld [vmem:[#allocation9 + $0x60] sm:$0xff]
    %v263 = vld [vmem:[#allocation9 + $0x68] sm:$0xff]
    %v264 = vld [vmem:[#allocation9 + $0x70] sm:$0xff]
    %v265 = vld [vmem:[#allocation9 + $0x78] sm:$0xff]
    %v266 = vld [vmem:[%s5] sm:$0x1]
    %v267 = vld [vmem:[#allocation2] sm:$0xff]
    %v268 = vld [vmem:[#allocation2 + $0x8] sm:$0xff]
    %v269 = vld [vmem:[#allocation2 + $0x10] sm:$0xff]
    %v270 = vld [vmem:[#allocation2 + $0x18] sm:$0xff]
    %v271 = vld [vmem:[#allocation2 + $0x20] sm:$0xff]
    %v272 = vld [vmem:[#allocation2 + $0x28] sm:$0xff]
    %v273 = vld [vmem:[#allocation2 + $0x30] sm:$0xff]
    %v274 = vld [vmem:[#allocation2 + $0x38] sm:$0xff]
    %275 = vmatprep.subr.mxu0 0.0
    %276 = vmatpush1.msra.mxu0 %v250
    %277 = vmatprep.subr.mxu0 0.0
    %278 = vmatpush1.msra.mxu0 %v251
    %279 = vmatprep.subr.mxu0 0.0
    %280 = vmatpush1.msra.mxu0 %v252
    %281 = vmatprep.subr.mxu0 0.0
    %282 = vmatpush1.msra.mxu0 %v253
    %283 = vmatprep.subr.mxu0 0.0
    %284 = vmatpush1.msra.mxu0 %v254
    %285 = vmatprep.subr.mxu0 0.0
    %286 = vmatpush1.msra.mxu0 %v255
    %287 = vmatprep.subr.mxu0 0.0
    %288 = vmatpush1.msra.mxu0 %v256
    %289 = vmatprep.subr.mxu0 0.0
    %290 = vmatpush1.msra.mxu0 %v257
    %291 = vmatprep.subr.mxu0 0.0
    %292 = vmatpush1.msra.mxu0 %v258
    %293 = vmatprep.subr.mxu0 0.0
    %294 = vmatpush1.msra.mxu0 %v259
    %295 = vmatprep.subr.mxu0 0.0
    %296 = vmatpush1.msra.mxu0 %v260
    %297 = vmatprep.subr.mxu0 0.0
    %298 = vmatpush1.msra.mxu0 %v261
    %299 = vmatprep.subr.mxu0 0.0
    %300 = vmatpush1.msra.mxu0 %v262
    %301 = vmatprep.subr.mxu0 0.0
    %302 = vmatpush1.msra.mxu0 %v263
    %303 = vmatprep.subr.mxu0 0.0
    %304 = vmatpush1.msra.mxu0 %v264
    %305 = vmatprep.subr.mxu0 0.0
    %306 = vmatpush1.msra.mxu0 %v265
    %307 = vmatprep.subr.mxu0 0.0
    %308 = vmatpush1.msra.mxu0 0.0
    %309 = vmatprep.subr.mxu0 0.0
    %310 = vmatpush1.msra.mxu0 0.0
    %311 = vmatprep.subr.mxu0 0.0
    %312 = vmatpush1.msra.mxu0 0.0
    %313 = vmatprep.subr.mxu0 0.0
    %314 = vmatpush1.msra.mxu0 0.0
    %315 = vmatprep.subr.mxu0 0.0
    %316 = vmatpush1.msra.mxu0 0.0
    %317 = vmatprep.subr.mxu0 0.0
    %318 = vmatpush1.msra.mxu0 0.0
    %319 = vmatprep.subr.mxu0 0.0
    %320 = vmatpush1.msra.mxu0 0.0
    %321 = vmatprep.subr.mxu0 0.0
    %322 = vmatpush1.msra.mxu0 0.0
    %323 = vmatprep.subr.mxu0 0.0
    %324 = vmatpush1.msra.mxu0 0.0
    %325 = vmatprep.subr.mxu0 0.0
    %326 = vmatpush1.msra.mxu0 0.0
    %327 = vmatprep.subr.mxu0 0.0
    %328 = vmatpush1.msra.mxu0 0.0
    %329 = vmatprep.subr.mxu0 0.0
    %330 = vmatpush1.msra.mxu0 0.0
    %331 = vmatprep.subr.mxu0 0.0
    %332 = vmatpush1.msra.mxu0 0.0
    %333 = vmatprep.subr.mxu0 0.0
    %334 = vmatpush1.msra.mxu0 0.0
    %335 = vmatprep.subr.mxu0 0.0
    %336 = vmatpush1.msra.mxu0 0.0
    %337 = vmatprep.subr.mxu0 0.0
    %338 = vmatpush1.msra.mxu0 0.0
    %339 = vmatprep.mubr.f32.mxu0 0.0
    %340 = vmatmul.mubr.f32.gmra.mrb[0].mxu0 %v267
    %v341 = vpop.f32.mrb[0].mxu0
    %v342 = vadd.f32 0.0, %v341
    %v343 = vpop.f32.mrb[0].mxu0
    %344 = vmatprep.mubr.f32.mxu0 0.0
    %345 = vmatmul.mubr.f32.gmra.mrb[0].mxu0 %v268
    %v346 = vpop.f32.mrb[0].mxu0
    %v347 = vadd.f32 0.0, %v346
    %v348 = vpop.f32.mrb[0].mxu0
    %349 = vmatprep.mubr.f32.mxu0 0.0
    %350 = vmatmul.mubr.f32.gmra.mrb[0].mxu0 %v269
    %v351 = vpop.f32.mrb[0].mxu0
    %v352 = vadd.f32 0.0, %v351
    %v353 = vpop.f32.mrb[0].mxu0
    %354 = vmatprep.mubr.f32.mxu0 0.0
    %355 = vmatmul.mubr.f32.gmra.mrb[0].mxu0 %v270
    %v356 = vpop.f32.mrb[0].mxu0
    %v357 = vadd.f32 0.0, %v356
    %v358 = vpop.f32.mrb[0].mxu0
    %359 = vmatprep.mubr.f32.mxu0 0.0
    %360 = vmatmul.mubr.f32.gmra.mrb[0].mxu0 %v271
    %v361 = vpop.f32.mrb[0].mxu0
    %v362 = vadd.f32 0.0, %v361
    %v363 = vpop.f32.mrb[0].mxu0
    %364 = vmatprep.mubr.f32.mxu0 0.0
    %365 = vmatmul.mubr.f32.gmra.mrb[0].mxu0 %v272
    %v366 = vpop.f32.mrb[0].mxu0
    %v367 = vadd.f32 0.0, %v366
    %v368 = vpop.f32.mrb[0].mxu0
    %369 = vmatprep.mubr.f32.mxu0 0.0
    %370 = vmatmul.mubr.f32.gmra.mrb[0].mxu0 %v273
    %v371 = vpop.f32.mrb[0].mxu0
    %v372 = vadd.f32 0.0, %v371
    %v373 = vpop.f32.mrb[0].mxu0
    %374 = vmatprep.mubr.f32.mxu0 0.0
    %375 = vmatmul.mubr.f32.gmra.mrb[0].mxu0 %v274
    %v376 = vpop.f32.mrb[0].mxu0
    %v377 = vadd.f32 0.0, %v376
    %v378 = vpop.f32.mrb[0].mxu0
    %379 = vdwg.mxu0
    %v381 = vlaneseq
    %v382 = vshrl.u32 %v381, 7
    %v383 = vsub.s32 0, %v382
    %v384 = vrot.slane %v266, %v383
    %vm386 = vcmask 523264
    %v388 = vsel %vm386, %v242, 0
    %v391 = vsel %vm386, %v243, 0
    %v394 = vsel %vm386, %v244, 0
    %v397 = vsel %vm386, %v245, 0
    %v400 = vsel %vm386, %v246, 0
    %v403 = vsel %vm386, %v247, 0
    %v406 = vsel %vm386, %v248, 0
    %v409 = vsel %vm386, %v249, 0
    %411 = vmatprep.subr.mxu0 0.0
    %412 = vmatpush1.msra.mxu0 %v342
    %413 = vmatprep.subr.mxu0 0.0
    %414 = vmatpush1.msra.mxu0 %v347
    %415 = vmatprep.subr.mxu0 0.0
    %416 = vmatpush1.msra.mxu0 %v352
    %417 = vmatprep.subr.mxu0 0.0
    %418 = vmatpush1.msra.mxu0 %v357
    %419 = vmatprep.subr.mxu0 0.0
    %420 = vmatpush1.msra.mxu0 %v362
    %421 = vmatprep.subr.mxu0 0.0
    %422 = vmatpush1.msra.mxu0 %v367
    %423 = vmatprep.subr.mxu0 0.0
    %424 = vmatpush1.msra.mxu0 %v372
    %425 = vmatprep.subr.mxu0 0.0
    %426 = vmatpush1.msra.mxu0 %v377
    %427 = vmatprep.subr.mxu0 0.0
    %428 = vmatpush1.msra.mxu0 0.0
    %429 = vmatprep.subr.mxu0 0.0
    %430 = vmatpush1.msra.mxu0 0.0
    %431 = vmatprep.subr.mxu0 0.0
    %432 = vmatpush1.msra.mxu0 0.0
    %433 = vmatprep.subr.mxu0 0.0
    %434 = vmatpush1.msra.mxu0 0.0
    %435 = vmatprep.subr.mxu0 0.0
    %436 = vmatpush1.msra.mxu0 0.0
    %437 = vmatprep.subr.mxu0 0.0
    %438 = vmatpush1.msra.mxu0 0.0
    %439 = vmatprep.subr.mxu0 0.0
    %440 = vmatpush1.msra.mxu0 0.0
    %441 = vmatprep.subr.mxu0 0.0
    %442 = vmatpush1.msra.mxu0 0.0
    %443 = vmatprep.subr.mxu0 0.0
    %444 = vmatpush1.msra.mxu0 0.0
    %445 = vmatprep.subr.mxu0 0.0
    %446 = vmatpush1.msra.mxu0 0.0
    %447 = vmatprep.subr.mxu0 0.0
    %448 = vmatpush1.msra.mxu0 0.0
    %449 = vmatprep.subr.mxu0 0.0
    %450 = vmatpush1.msra.mxu0 0.0
    %451 = vmatprep.subr.mxu0 0.0
    %452 = vmatpush1.msra.mxu0 0.0
    %453 = vmatprep.subr.mxu0 0.0
    %454 = vmatpush1.msra.mxu0 0.0
    %455 = vmatprep.subr.mxu0 0.0
    %456 = vmatpush1.msra.mxu0 0.0
    %457 = vmatprep.subr.mxu0 0.0
    %458 = vmatpush1.msra.mxu0 0.0
    %459 = vmatprep.subr.mxu0 0.0
    %460 = vmatpush1.msra.mxu0 0.0
    %461 = vmatprep.subr.mxu0 0.0
    %462 = vmatpush1.msra.mxu0 0.0
    %463 = vmatprep.subr.mxu0 0.0
    %464 = vmatpush1.msra.mxu0 0.0
    %465 = vmatprep.subr.mxu0 0.0
    %466 = vmatpush1.msra.mxu0 0.0
    %467 = vmatprep.subr.mxu0 0.0
    %468 = vmatpush1.msra.mxu0 0.0
    %469 = vmatprep.subr.mxu0 0.0
    %470 = vmatpush1.msra.mxu0 0.0
    %471 = vmatprep.subr.mxu0 0.0
    %472 = vmatpush1.msra.mxu0 0.0
    %473 = vmatprep.subr.mxu0 0.0
    %474 = vmatpush1.msra.mxu0 0.0
    %475 = vmatprep.mubr.f32.mxu0 0.0
    %476 = vmatmul.mubr.f32.gmra.mrb[0].mxu0 %v388
    %v477 = vpop.f32.mrb[0].mxu0
    %v478 = vadd.f32 %v384, %v477
    %v479 = vpop.f32.mrb[0].mxu0
    %480 = vmatprep.mubr.f32.mxu0 0.0
    %481 = vmatmul.mubr.f32.gmra.mrb[0].mxu0 %v391
    %v482 = vpop.f32.mrb[0].mxu0
    %v483 = vadd.f32 %v384, %v482
    %v484 = vpop.f32.mrb[0].mxu0
    %485 = vmatprep.mubr.f32.mxu0 0.0
    %486 = vmatmul.mubr.f32.gmra.mrb[0].mxu0 %v394
    %v487 = vpop.f32.mrb[0].mxu0
    %v488 = vadd.f32 %v384, %v487
    %v489 = vpop.f32.mrb[0].mxu0
    %490 = vmatprep.mubr.f32.mxu0 0.0
    %491 = vmatmul.mubr.f32.gmra.mrb[0].mxu0 %v397
    %v492 = vpop.f32.mrb[0].mxu0
    %v493 = vadd.f32 %v384, %v492
    %v494 = vpop.f32.mrb[0].mxu0
    %495 = vmatprep.mubr.f32.mxu0 0.0
    %496 = vmatmul.mubr.f32.gmra.mrb[0].mxu0 %v400
    %v497 = vpop.f32.mrb[0].mxu0
    %v498 = vadd.f32 %v384, %v497
    %v499 = vpop.f32.mrb[0].mxu0
    %500 = vmatprep.mubr.f32.mxu0 0.0
    %501 = vmatmul.mubr.f32.gmra.mrb[0].mxu0 %v403
    %v502 = vpop.f32.mrb[0].mxu0
    %v503 = vadd.f32 %v384, %v502
    %v504 = vpop.f32.mrb[0].mxu0
    %505 = vmatprep.mubr.f32.mxu0 0.0
    %506 = vmatmul.mubr.f32.gmra.mrb[0].mxu0 %v406
    %v507 = vpop.f32.mrb[0].mxu0
    %v508 = vadd.f32 %v384, %v507
    %v509 = vpop.f32.mrb[0].mxu0
    %510 = vmatprep.mubr.f32.mxu0 0.0
    %511 = vmatmul.mubr.f32.gmra.mrb[0].mxu0 %v409
    %v512 = vpop.f32.mrb[0].mxu0
    %v513 = vadd.f32 %v384, %v512
    %v514 = vpop.f32.mrb[0].mxu0
    %515 = vdwg.mxu0
    %v516 = vmax.f32 %v478, 0.0
    %v517 = vmax.f32 %v483, 0.0
    %v518 = vmax.f32 %v488, 0.0
    %v519 = vmax.f32 %v493, 0.0
    %v520 = vmax.f32 %v498, 0.0
    %v521 = vmax.f32 %v503, 0.0
    %v522 = vmax.f32 %v508, 0.0
    %v523 = vmax.f32 %v513, 0.0
    %524 = vst [vmem:[#allocation2] sm:$0xff] %v516
    %525 = vst [vmem:[#allocation2 + $0x8] sm:$0xff] %v517
    %526 = vst [vmem:[#allocation2 + $0x10] sm:$0xff] %v518
    %527 = vst [vmem:[#allocation2 + $0x18] sm:$0xff] %v519
    %528 = vst [vmem:[#allocation2 + $0x20] sm:$0xff] %v520
    %529 = vst [vmem:[#allocation2 + $0x28] sm:$0xff] %v521
    %530 = vst [vmem:[#allocation2 + $0x30] sm:$0xff] %v522
    %531 = vst [vmem:[#allocation2 + $0x38] sm:$0xff] %v523
    %v532 = vld [vmem:[#allocation11] sm:$0xff]
    %v533 = vld [vmem:[#allocation11 + $0x8] sm:$0xff]
    %v534 = vld [vmem:[#allocation11 + $0x10] sm:$0xff]
    %v535 = vld [vmem:[#allocation11 + $0x18] sm:$0xff]
    %v536 = vld [vmem:[#allocation11 + $0x20] sm:$0xff]
    %v537 = vld [vmem:[#allocation11 + $0x28] sm:$0xff]
    %v538 = vld [vmem:[#allocation11 + $0x30] sm:$0xff]
    %v539 = vld [vmem:[#allocation11 + $0x38] sm:$0xff]
    %v540 = vld [vmem:[#allocation11 + $0x40] sm:$0xff]
    %v541 = vld [vmem:[#allocation11 + $0x48] sm:$0xff]
    %v542 = vld [vmem:[#allocation11 + $0x50] sm:$0xff]
    %v543 = vld [vmem:[#allocation11 + $0x58] sm:$0xff]
    %v544 = vld [vmem:[#allocation11 + $0x60] sm:$0xff]
    %v545 = vld [vmem:[#allocation11 + $0x68] sm:$0xff]
    %v546 = vld [vmem:[#allocation11 + $0x70] sm:$0xff]
    %v547 = vld [vmem:[#allocation11 + $0x78] sm:$0xff]
    %v548 = vld [vmem:[%s7] sm:$0x1]
    %v549 = vld [vmem:[#allocation2] sm:$0xff]
    %v550 = vld [vmem:[#allocation2 + $0x8] sm:$0xff]
    %v551 = vld [vmem:[#allocation2 + $0x10] sm:$0xff]
    %v552 = vld [vmem:[#allocation2 + $0x18] sm:$0xff]
    %v553 = vld [vmem:[#allocation2 + $0x20] sm:$0xff]
    %v554 = vld [vmem:[#allocation2 + $0x28] sm:$0xff]
    %v555 = vld [vmem:[#allocation2 + $0x30] sm:$0xff]
    %v556 = vld [vmem:[#allocation2 + $0x38] sm:$0xff]
    %557 = vmatprep.subr.mxu0 0.0
    %558 = vmatpush1.msra.mxu0 %v532
    %559 = vmatprep.subr.mxu0 0.0
    %560 = vmatpush1.msra.mxu0 %v533
    %561 = vmatprep.subr.mxu0 0.0
    %562 = vmatpush1.msra.mxu0 %v534
    %563 = vmatprep.subr.mxu0 0.0
    %564 = vmatpush1.msra.mxu0 %v535
    %565 = vmatprep.subr.mxu0 0.0
    %566 = vmatpush1.msra.mxu0 %v536
    %567 = vmatprep.subr.mxu0 0.0
    %568 = vmatpush1.msra.mxu0 %v537
    %569 = vmatprep.subr.mxu0 0.0
    %570 = vmatpush1.msra.mxu0 %v538
    %571 = vmatprep.subr.mxu0 0.0
    %572 = vmatpush1.msra.mxu0 %v539
    %573 = vmatprep.subr.mxu0 0.0
    %574 = vmatpush1.msra.mxu0 %v540
    %575 = vmatprep.subr.mxu0 0.0
    %576 = vmatpush1.msra.mxu0 %v541
    %577 = vmatprep.subr.mxu0 0.0
    %578 = vmatpush1.msra.mxu0 %v542
    %579 = vmatprep.subr.mxu0 0.0
    %580 = vmatpush1.msra.mxu0 %v543
    %581 = vmatprep.subr.mxu0 0.0
    %582 = vmatpush1.msra.mxu0 %v544
    %583 = vmatprep.subr.mxu0 0.0
    %584 = vmatpush1.msra.mxu0 %v545
    %585 = vmatprep.subr.mxu0 0.0
    %586 = vmatpush1.msra.mxu0 %v546
    %587 = vmatprep.subr.mxu0 0.0
    %588 = vmatpush1.msra.mxu0 %v547
    %589 = vmatprep.subr.mxu0 0.0
    %590 = vmatpush1.msra.mxu0 0.0
    %591 = vmatprep.subr.mxu0 0.0
    %592 = vmatpush1.msra.mxu0 0.0
    %593 = vmatprep.subr.mxu0 0.0
    %594 = vmatpush1.msra.mxu0 0.0
    %595 = vmatprep.subr.mxu0 0.0
    %596 = vmatpush1.msra.mxu0 0.0
    %597 = vmatprep.subr.mxu0 0.0
    %598 = vmatpush1.msra.mxu0 0.0
    %599 = vmatprep.subr.mxu0 0.0
    %600 = vmatpush1.msra.mxu0 0.0
    %601 = vmatprep.subr.mxu0 0.0
    %602 = vmatpush1.msra.mxu0 0.0
    %603 = vmatprep.subr.mxu0 0.0
    %604 = vmatpush1.msra.mxu0 0.0
    %605 = vmatprep.subr.mxu0 0.0
    %606 = vmatpush1.msra.mxu0 0.0
    %607 = vmatprep.subr.mxu0 0.0
    %608 = vmatpush1.msra.mxu0 0.0
    %609 = vmatprep.subr.mxu0 0.0
    %610 = vmatpush1.msra.mxu0 0.0
    %611 = vmatprep.subr.mxu0 0.0
    %612 = vmatpush1.msra.mxu0 0.0
    %613 = vmatprep.subr.mxu0 0.0
    %614 = vmatpush1.msra.mxu0 0.0
    %615 = vmatprep.subr.mxu0 0.0
    %616 = vmatpush1.msra.mxu0 0.0
    %617 = vmatprep.subr.mxu0 0.0
    %618 = vmatpush1.msra.mxu0 0.0
    %619 = vmatprep.subr.mxu0 0.0
    %620 = vmatpush1.msra.mxu0 0.0
    %621 = vmatprep.mubr.f32.mxu0 0.0
    %622 = vmatmul.mubr.f32.gmra.mrb[0].mxu0 %v549
    %v623 = vpop.f32.mrb[0].mxu0
    %v624 = vadd.f32 0.0, %v623
    %v625 = vpop.f32.mrb[0].mxu0
    %626 = vmatprep.mubr.f32.mxu0 0.0
    %627 = vmatmul.mubr.f32.gmra.mrb[0].mxu0 %v550
    %v628 = vpop.f32.mrb[0].mxu0
    %v629 = vadd.f32 0.0, %v628
    %v630 = vpop.f32.mrb[0].mxu0
    %631 = vmatprep.mubr.f32.mxu0 0.0
    %632 = vmatmul.mubr.f32.gmra.mrb[0].mxu0 %v551
    %v633 = vpop.f32.mrb[0].mxu0
    %v634 = vadd.f32 0.0, %v633
    %v635 = vpop.f32.mrb[0].mxu0
    %636 = vmatprep.mubr.f32.mxu0 0.0
    %637 = vmatmul.mubr.f32.gmra.mrb[0].mxu0 %v552
    %v638 = vpop.f32.mrb[0].mxu0
    %v639 = vadd.f32 0.0, %v638
    %v640 = vpop.f32.mrb[0].mxu0
    %641 = vmatprep.mubr.f32.mxu0 0.0
    %642 = vmatmul.mubr.f32.gmra.mrb[0].mxu0 %v553
    %v643 = vpop.f32.mrb[0].mxu0
    %v644 = vadd.f32 0.0, %v643
    %v645 = vpop.f32.mrb[0].mxu0
    %646 = vmatprep.mubr.f32.mxu0 0.0
    %647 = vmatmul.mubr.f32.gmra.mrb[0].mxu0 %v554
    %v648 = vpop.f32.mrb[0].mxu0
    %v649 = vadd.f32 0.0, %v648
    %v650 = vpop.f32.mrb[0].mxu0
    %651 = vmatprep.mubr.f32.mxu0 0.0
    %652 = vmatmul.mubr.f32.gmra.mrb[0].mxu0 %v555
    %v653 = vpop.f32.mrb[0].mxu0
    %v654 = vadd.f32 0.0, %v653
    %v655 = vpop.f32.mrb[0].mxu0
    %656 = vmatprep.mubr.f32.mxu0 0.0
    %657 = vmatmul.mubr.f32.gmra.mrb[0].mxu0 %v556
    %v658 = vpop.f32.mrb[0].mxu0
    %v659 = vadd.f32 0.0, %v658
    %v660 = vpop.f32.mrb[0].mxu0
    %661 = vdwg.mxu0
    %v663 = vlaneseq
    %v664 = vshrl.u32 %v663, 7
    %v665 = vsub.s32 0, %v664
    %v666 = vrot.slane %v548, %v665
    %668 = vmatprep.subr.mxu0 0.0
    %669 = vmatpush1.msra.mxu0 %v624
    %670 = vmatprep.subr.mxu0 0.0
    %671 = vmatpush1.msra.mxu0 %v629
    %672 = vmatprep.subr.mxu0 0.0
    %673 = vmatpush1.msra.mxu0 %v634
    %674 = vmatprep.subr.mxu0 0.0
    %675 = vmatpush1.msra.mxu0 %v639
    %676 = vmatprep.subr.mxu0 0.0
    %677 = vmatpush1.msra.mxu0 %v644
    %678 = vmatprep.subr.mxu0 0.0
    %679 = vmatpush1.msra.mxu0 %v649
    %680 = vmatprep.subr.mxu0 0.0
    %681 = vmatpush1.msra.mxu0 %v654
    %682 = vmatprep.subr.mxu0 0.0
    %683 = vmatpush1.msra.mxu0 %v659
    %684 = vmatprep.subr.mxu0 0.0
    %685 = vmatpush1.msra.mxu0 0.0
    %686 = vmatprep.subr.mxu0 0.0
    %687 = vmatpush1.msra.mxu0 0.0
    %688 = vmatprep.subr.mxu0 0.0
    %689 = vmatpush1.msra.mxu0 0.0
    %690 = vmatprep.subr.mxu0 0.0
    %691 = vmatpush1.msra.mxu0 0.0
    %692 = vmatprep.subr.mxu0 0.0
    %693 = vmatpush1.msra.mxu0 0.0
    %694 = vmatprep.subr.mxu0 0.0
    %695 = vmatpush1.msra.mxu0 0.0
    %696 = vmatprep.subr.mxu0 0.0
    %697 = vmatpush1.msra.mxu0 0.0
    %698 = vmatprep.subr.mxu0 0.0
    %699 = vmatpush1.msra.mxu0 0.0
    %700 = vmatprep.subr.mxu0 0.0
    %701 = vmatpush1.msra.mxu0 0.0
    %702 = vmatprep.subr.mxu0 0.0
    %703 = vmatpush1.msra.mxu0 0.0
    %704 = vmatprep.subr.mxu0 0.0
    %705 = vmatpush1.msra.mxu0 0.0
    %706 = vmatprep.subr.mxu0 0.0
    %707 = vmatpush1.msra.mxu0 0.0
    %708 = vmatprep.subr.mxu0 0.0
    %709 = vmatpush1.msra.mxu0 0.0
    %710 = vmatprep.subr.mxu0 0.0
    %711 = vmatpush1.msra.mxu0 0.0
    %712 = vmatprep.subr.mxu0 0.0
    %713 = vmatpush1.msra.mxu0 0.0
    %714 = vmatprep.subr.mxu0 0.0
    %715 = vmatpush1.msra.mxu0 0.0
    %716 = vmatprep.subr.mxu0 0.0
    %717 = vmatpush1.msra.mxu0 0.0
    %718 = vmatprep.subr.mxu0 0.0
    %719 = vmatpush1.msra.mxu0 0.0
    %720 = vmatprep.subr.mxu0 0.0
    %721 = vmatpush1.msra.mxu0 0.0
    %722 = vmatprep.subr.mxu0 0.0
    %723 = vmatpush1.msra.mxu0 0.0
    %724 = vmatprep.subr.mxu0 0.0
    %725 = vmatpush1.msra.mxu0 0.0
    %726 = vmatprep.subr.mxu0 0.0
    %727 = vmatpush1.msra.mxu0 0.0
    %728 = vmatprep.subr.mxu0 0.0
    %729 = vmatpush1.msra.mxu0 0.0
    %730 = vmatprep.subr.mxu0 0.0
    %731 = vmatpush1.msra.mxu0 0.0
    %732 = vmatprep.mubr.f32.mxu0 0.0
    %733 = vmatmul.mubr.f32.gmra.mrb[0].mxu0 %v388
    %v734 = vpop.f32.mrb[0].mxu0
    %v735 = vadd.f32 %v666, %v734
    %v736 = vpop.f32.mrb[0].mxu0
    %737 = vmatprep.mubr.f32.mxu0 0.0
    %738 = vmatmul.mubr.f32.gmra.mrb[0].mxu0 %v391
    %v739 = vpop.f32.mrb[0].mxu0
    %v740 = vadd.f32 %v666, %v739
    %v741 = vpop.f32.mrb[0].mxu0
    %742 = vmatprep.mubr.f32.mxu0 0.0
    %743 = vmatmul.mubr.f32.gmra.mrb[0].mxu0 %v394
    %v744 = vpop.f32.mrb[0].mxu0
    %v745 = vadd.f32 %v666, %v744
    %v746 = vpop.f32.mrb[0].mxu0
    %747 = vmatprep.mubr.f32.mxu0 0.0
    %748 = vmatmul.mubr.f32.gmra.mrb[0].mxu0 %v397
    %v749 = vpop.f32.mrb[0].mxu0
    %v750 = vadd.f32 %v666, %v749
    %v751 = vpop.f32.mrb[0].mxu0
    %752 = vmatprep.mubr.f32.mxu0 0.0
    %753 = vmatmul.mubr.f32.gmra.mrb[0].mxu0 %v400
    %v754 = vpop.f32.mrb[0].mxu0
    %v755 = vadd.f32 %v666, %v754
    %v756 = vpop.f32.mrb[0].mxu0
    %757 = vmatprep.mubr.f32.mxu0 0.0
    %758 = vmatmul.mubr.f32.gmra.mrb[0].mxu0 %v403
    %v759 = vpop.f32.mrb[0].mxu0
    %v760 = vadd.f32 %v666, %v759
    %v761 = vpop.f32.mrb[0].mxu0
    %762 = vmatprep.mubr.f32.mxu0 0.0
    %763 = vmatmul.mubr.f32.gmra.mrb[0].mxu0 %v406
    %v764 = vpop.f32.mrb[0].mxu0
    %v765 = vadd.f32 %v666, %v764
    %v766 = vpop.f32.mrb[0].mxu0
    %767 = vmatprep.mubr.f32.mxu0 0.0
    %768 = vmatmul.mubr.f32.gmra.mrb[0].mxu0 %v409
    %v769 = vpop.f32.mrb[0].mxu0
    %v770 = vadd.f32 %v666, %v769
    %v771 = vpop.f32.mrb[0].mxu0
    %772 = vdwg.mxu0
    %773 = vst [vmem:[#allocation12] sm:$0xff] %v735
    %774 = vst [vmem:[#allocation12 + $0x8] sm:$0xff] %v740
    %775 = vst [vmem:[#allocation12 + $0x10] sm:$0xff] %v745
    %776 = vst [vmem:[#allocation12 + $0x18] sm:$0xff] %v750
    %777 = vst [vmem:[#allocation12 + $0x20] sm:$0xff] %v755
    %778 = vst [vmem:[#allocation12 + $0x28] sm:$0xff] %v760
    %779 = vst [vmem:[#allocation12 + $0x30] sm:$0xff] %v765
    %780 = vst [vmem:[#allocation12 + $0x38] sm:$0xff] %v770
    // Predicated region
    $region54: #{tpu_custom_call.1} parent=1 // pred_check
      _
    $region55: #{tpu_custom_call.1} parent=1 // pred_check_branch
      %782 = sbr.rel (0) target = $region57
    $region56: #{tpu_custom_call.1} parent=1 // pred_region
      %s784 = ssub.s32 1024, 1024
      %785 = vsyncadd [#allocation5], %s784
      %s786 = sshll.u32 [#allocation12], 4
      %s787 = int_to_ptr.vmem [resolvable:$true] %s786
      %792 = dma.vmem_to_hbm [thread:$0]  %s787, 1024, %s8, [#allocation5], 128, 128, 8
    $region57: #{tpu_custom_call.1} parent=1 // pred_fallthru
      _
    // Predicated region
    $region58: #{tpu_custom_call.1} parent=1 // pred_check
      _
    $region59: #{tpu_custom_call.1} parent=1 // pred_check_branch
      %794 = sbr.rel (0) target = $region61
    $region60: #{tpu_custom_call.1} parent=1 // pred_region
      %795 = dma.done [#allocation5], 1024
    $region61: #{tpu_custom_call.1} parent=1 // pred_fallthru
      _
    %796 = vsyncpa [#allocation4], 1
    %797 = vsyncpa [#allocation7], 1
    %798 = vsyncpa [#allocation10], 1
    %799 = vsyncpa [#allocation5], 1

</llo_original>
